<compile_context>
chip_gen: v6e
topology: v6e:2x2x1
jax: 0.10.0
libtpu: 0.0.40
codegen_flags: <defaults>
</compile_context>

<pallas_src>
from typing import NamedTuple

import jax
import jax.numpy as jnp
from jax.experimental import pallas as pl
from jax.experimental.pallas import tpu as pltpu


def _round_up(x, m):
    return (x + m - 1) // m * m


class LSTMParams(NamedTuple):
    w_x: jax.Array   # (E, 5*Rp)   gate-padded i2h weight (applied OUTSIDE the recurrence)
    w_h: jax.Array   # (Rp, 5*Rp)  row+gate padded h2h weight (VMEM-resident inside kernel)
    b: jax.Array     # (1, 5*Rp)   pre-summed f32 bias (folded into the hoisted projection)
    R: int
    Rp: int


def pack_lstm_params(w_i2h, b_i2h, w_h2h, b_h2h, param_dtype=None):
    """Pack LSTMCore parameters once (outside any time loop).

    w_i2h: (E, 5R)  torch i2h.weight transposed
    b_i2h: (5R,)
    w_h2h: (R, 5R)  torch h2h.weight transposed
    b_h2h: (5R,)
    param_dtype: weight compute dtype.  jnp.bfloat16 is recommended on ALL TPU
        generations (v5e, v6e, v7x) - the MXU is bf16-native everywhere and it
        halves the weight DMA (biggest relative win on v5e's lower HBM BW);
        accumulation stays float32 on the MXU.  Defaults to the incoming dtype.

    Gate columns are padded to Rp = round_up(R, 128) so each gate is a whole
    number of 128-lane blocks (vreg-aligned gate slices, lane-dense stores).
    Padded weight columns / bias lanes are ZERO - this keeps padded lanes of
    h/c exactly zero across the whole recurrence (do not break this invariant).
    # TODO(synk): for genuinely tiny R (<128) this 4x-inflates the weight /
    # matmul N / writeback; a 5R->256 total-lane padding with one rolled gate
    # extraction would be cheaper on v5e.  Moot whenever R is a multiple of 128.
    """
    E, five_r = w_i2h.shape
    R = five_r // 5
    Rp = _round_up(R, 128)
    if param_dtype is None:
        param_dtype = w_i2h.dtype

    b = b_i2h.astype(jnp.float32) + b_h2h.astype(jnp.float32)          # (5R,)

    if Rp != R:
        pad = Rp - R
        w_x = jnp.pad(w_i2h.reshape(E, 5, R), ((0, 0), (0, 0), (0, pad)))
        w_h = jnp.pad(w_h2h.reshape(R, 5, R), ((0, pad), (0, 0), (0, pad)))
        b = jnp.pad(b.reshape(5, R), ((0, 0), (0, pad)))
    else:
        w_x = w_i2h.reshape(E, 5, R)
        w_h = w_h2h.reshape(R, 5, R)
        b = b.reshape(5, R)

    return LSTMParams(
        w_x=w_x.reshape(E, 5 * Rp).astype(param_dtype),
        w_h=w_h.reshape(Rp, 5 * Rp).astype(param_dtype),
        b=b.reshape(1, 5 * Rp).astype(jnp.float32),
        R=R,
        Rp=Rp,
    )


def _sigmoid(x):
    # exp -> EUP, reciprocal (approx) -> EUP: keeps the elementwise tail off the VALU.
    return pl.reciprocal(1.0 + jnp.exp(-x), approx=True)


def _lstm_seq_kernel(sx_ref, h0_ref, c0_ref, wh_ref,
                     h_all_ref, c_fin_ref, h_scr, c_scr):
    """One grid step = one LSTM timestep.

    sx_ref:    (1, B, 5*Rp) f32  hoisted i2h(x_t) + bias (per-step block)
    h0_ref:    (B, Rp)      f32  initial hidden state (constant block)
    c0_ref:    (B, Rp)      f32  initial cell state   (constant block)
    wh_ref:    (Rp, 5*Rp)        h2h weight, VMEM-resident across the grid
    h_all_ref: (1, B, Rp)        per-step hidden output
    c_fin_ref: (B, Rp)      f32  final cell state (constant block, written at t=T-1)
    h_scr, c_scr: (B, Rp)   f32  state carried across grid steps
    """
    Rp = c_scr.shape[1]
    t = pl.program_id(0)

    @pl.when(t == 0)
    def _():
        h_scr[...] = h0_ref[...]
        c_scr[...] = c0_ref[...]

    # all_input_sums = i2h(x_t) + b_i2h + b_h2h  (precomputed, sx)  +  h2h(h_prev)
    s = sx_ref[0] + jnp.dot(h_scr[...].astype(wh_ref.dtype), wh_ref[...],
                            preferred_element_type=jnp.float32)

    # Gate slices are multiples of Rp (a multiple of 128) -> vreg-aligned views.
    in_gate = _sigmoid(s[:, 0 * Rp:1 * Rp])
    forget_gate = _sigmoid(s[:, 1 * Rp:2 * Rp])
    out_gate = _sigmoid(s[:, 2 * Rp:3 * Rp])
    in_transform = jnp.maximum(s[:, 3 * Rp:4 * Rp], s[:, 4 * Rp:5 * Rp])

    next_c = forget_gate * c_scr[...] + in_gate * in_transform     # f32
    next_h = out_gate * jnp.tanh(next_c)                           # f32

    c_scr[...] = next_c            # cell state stays f32 across the recurrence
    h_scr[...] = next_h
    h_all_ref[0] = next_h.astype(h_all_ref.dtype)

    @pl.when(t == pl.num_programs(0) - 1)
    def _():
        c_fin_ref[...] = next_c


def lstm_core_sequence(x_seq, h0, c0, params: LSTMParams):
    """Run T LSTMCore steps in one pallas_call (eval mode).

    x_seq: (T, B, E);  h0, c0: (B, R).
    Returns (h_all (T, B, R) in x dtype, h_final (B, R), c_final (B, R) float32).
    """
    T, B, E = x_seq.shape
    R, Rp = params.R, params.Rp
    act_dtype = x_seq.dtype
    pad = Rp - R

    # Hoisted input projection for ALL timesteps: one big matmul (M = T*B),
    # f32 accumulation, pre-summed bias folded in.
    sx = jnp.dot(x_seq.reshape(T * B, E).astype(params.w_x.dtype), params.w_x,
                 preferred_element_type=jnp.float32)
    sx = (sx + params.b).reshape(T, B, 5 * Rp)

    # Pad the initial state once; padded lanes stay exactly zero across steps.
    h0p = h0.astype(jnp.float32)
    c0p = c0.astype(jnp.float32)
    if pad:
        h0p = jnp.pad(h0p, ((0, 0), (0, pad)))
        c0p = jnp.pad(c0p, ((0, 0), (0, pad)))

    grid_spec = pltpu.PrefetchScalarGridSpec(
        num_scalar_prefetch=0,
        grid=(T,),
        in_specs=[
            pl.BlockSpec((1, B, 5 * Rp), lambda t: (t, 0, 0)),   # sx[t]
            pl.BlockSpec((B, Rp), lambda t: (0, 0)),             # h0 (DMA'd once)
            pl.BlockSpec((B, Rp), lambda t: (0, 0)),             # c0 (DMA'd once)
            pl.BlockSpec((Rp, 5 * Rp), lambda t: (0, 0)),        # w_h (VMEM-resident)
        ],
        out_specs=(
            pl.BlockSpec((1, B, Rp), lambda t: (t, 0, 0)),       # h_all[t]
            pl.BlockSpec((B, Rp), lambda t: (0, 0)),             # c_final (resident)
        ),
        scratch_shapes=[
            pltpu.VMEM((B, Rp), jnp.float32),                    # h carry
            pltpu.VMEM((B, Rp), jnp.float32),                    # c carry
        ],
    )

    h_all_p, c_fin_p = pl.pallas_call(
        _lstm_seq_kernel,
        out_shape=(
            jax.ShapeDtypeStruct((T, B, Rp), act_dtype),
            jax.ShapeDtypeStruct((B, Rp), jnp.float32),
        ),
        grid_spec=grid_spec,
        compiler_params=pltpu.CompilerParams(
            dimension_semantics=("arbitrary",)),                 # T is sequential
    )(sx, h0p, c0p, params.w_h)

    if pad:
        h_all = h_all_p[:, :, :R]
        c_fin = c_fin_p[:, :R]
    else:
        h_all, c_fin = h_all_p, c_fin_p
    return h_all, h_all[-1], c_fin


def lstm_core(xt, state, params: LSTMParams):
    """Single-step module API matching PyTorch LSTMCore.forward(xt, state).

    xt: (B, E); state = (h, c) with h, c of shape (1, B, R).
    Returns (output, (next_h[None], next_c[None])).  next_c is kept float32.
    For real decode loops prefer lstm_core_sequence (weights/state stay on-chip).
    """
    h_prev = state[0][-1]
    c_prev = state[1][-1]
    h_all, _, c_fin = lstm_core_sequence(xt[None, ...], h_prev, c_prev, params)
    next_h = h_all[0]
    output = next_h  # dropout is identity in eval mode
    return output, (next_h[None, ...], c_fin[None, ...])


# ----------------------------- references ---------------------------------- #

def reference_lstm_step(xt, h, c, w_i2h, b_i2h, w_h2h, b_h2h):
    """Plain-JAX reference mirroring the PyTorch forward (eval mode)."""
    R = h.shape[1]
    s = xt @ w_i2h + b_i2h + h @ w_h2h + b_h2h
    sig = jax.nn.sigmoid(s[:, :3 * R])
    i_g, f_g, o_g = sig[:, :R], sig[:, R:2 * R], sig[:, 2 * R:3 * R]
    g = jnp.maximum(s[:, 3 * R:4 * R], s[:, 4 * R:5 * R])
    c_new = f_g * c + i_g * g
    h_new = o_g * jnp.tanh(c_new)
    return h_new, c_new


def reference_lstm_sequence(x_seq, h0, c0, w_i2h, b_i2h, w_h2h, b_h2h):
    def step(carry, xt):
        h, c = carry
        h, c = reference_lstm_step(xt, h, c, w_i2h, b_i2h, w_h2h, b_h2h)
        return (h, c), h
    (hT, cT), h_all = jax.lax.scan(step, (h0, c0), x_seq)
    return h_all, hT, cT


if __name__ == "__main__":
    # opt.input_encoding_size = 32, opt.rnn_size = 32, batch = 2, seq = 8
    T, B, E, R = 8, 2, 32, 32
    key = jax.random.PRNGKey(0)
    k_x, k_h, k_c, k_wi, k_bi, k_wh, k_bh = jax.random.split(key, 7)

    x_seq = jax.random.normal(k_x, (T, B, E), jnp.float32)
    h0 = jax.random.normal(k_h, (B, R), jnp.float32)
    c0 = jax.random.normal(k_c, (B, R), jnp.float32)

    # Synthetic params (torch Linear weight (5R, in) stored pre-transposed (in, 5R)).
    w_i2h = jax.random.normal(k_wi, (E, 5 * R), jnp.float32) * 0.1
    b_i2h = jax.random.normal(k_bi, (5 * R,), jnp.float32) * 0.1
    w_h2h = jax.random.normal(k_wh, (R, 5 * R), jnp.float32) * 0.1
    b_h2h = jax.random.normal(k_bh, (5 * R,), jnp.float32) * 0.1

    # Pack once (outside any loop).  Pass param_dtype=jnp.bfloat16 in production
    # on any TPU generation; f32 here for a tight parity check vs. the reference.
    params = pack_lstm_params(w_i2h, b_i2h, w_h2h, b_h2h)

    # Fused T-step run: one pallas_call, weights VMEM-resident, h/c in scratch.
    h_all, h_fin, c_fin = lstm_core_sequence(x_seq, h0, c0, params)
    jax.block_until_ready((h_all, h_fin, c_fin))

    ref_h_all, ref_hT, ref_cT = reference_lstm_sequence(
        x_seq, h0, c0, w_i2h, b_i2h, w_h2h, b_h2h)

    # Tolerance covers the EUP approximate-reciprocal sigmoid accumulated over
    # T steps; structural bugs would be orders of magnitude larger.
    TOL = dict(atol=2e-2, rtol=2e-2)
    assert h_all.shape == (T, B, R) and c_fin.shape == (B, R)
    assert jnp.allclose(h_all, ref_h_all, **TOL)
    assert jnp.allclose(h_fin, ref_hT, **TOL)
    assert jnp.allclose(c_fin, ref_cT, **TOL)

    # Single-step module-API check (PyTorch forward(xt, state) semantics).
    state = (h0[None, ...], c0[None, ...])
    out1, (h1, c1) = lstm_core(x_seq[0], state, params)
    jax.block_until_ready((out1, h1, c1))
    ref_h1, ref_c1 = reference_lstm_step(x_seq[0], h0, c0,
                                         w_i2h, b_i2h, w_h2h, b_h2h)
    assert out1.shape == (B, R) and h1.shape == (1, B, R) and c1.shape == (1, B, R)
    assert jnp.allclose(out1, ref_h1, **TOL)
    assert jnp.allclose(h1[0], ref_h1, **TOL)
    assert jnp.allclose(c1[0], ref_c1, **TOL)

    print("KERNEL_OK")
</pallas_src>

<mosaic_0001>
module attributes {stable_mosaic.version = 11 : i64} {
  func.func @_lstm_seq_kernel(%arg0: i32, %arg1: memref<1x2x640xf32, #tpu.memory_space<vmem>>, %arg2: memref<2x128xf32, #tpu.memory_space<vmem>>, %arg3: memref<2x128xf32, #tpu.memory_space<vmem>>, %arg4: memref<128x640xf32, #tpu.memory_space<vmem>>, %arg5: memref<1x2x128xf32, #tpu.memory_space<vmem>>, %arg6: memref<2x128xf32, #tpu.memory_space<vmem>>, %arg7: memref<2x128xf32, #tpu.memory_space<vmem>>, %arg8: memref<2x128xf32, #tpu.memory_space<vmem>>) attributes {dimension_semantics = [#tpu.dimension_semantics<arbitrary>], iteration_bounds = array<i64: 8>, scalar_prefetch = 0 : i64, scratch_operands = 2 : i64, tpu.core_type = #tpu.core_type<tc>, window_params = [{transform_indices = @transform_0, window_bounds = array<i64: 1, 2, 640>}, {pipeline_mode = #tpu.pipeline_mode<synchronous>, transform_indices = @transform_1, window_bounds = array<i64: 2, 128>}, {pipeline_mode = #tpu.pipeline_mode<synchronous>, transform_indices = @transform_2, window_bounds = array<i64: 2, 128>}, {pipeline_mode = #tpu.pipeline_mode<synchronous>, transform_indices = @transform_3, window_bounds = array<i64: 128, 640>}, {transform_indices = @transform_4, window_bounds = array<i64: 1, 2, 128>}, {pipeline_mode = #tpu.pipeline_mode<synchronous>, transform_indices = @transform_5, window_bounds = array<i64: 2, 128>}]} {
    %c0_i32 = arith.constant 0 : i32
    %0 = arith.cmpi eq, %arg0, %c0_i32 : i32
    %1 = arith.extui %0 : i1 to i32
    %c0_i32_0 = arith.constant 0 : i32
    %2 = arith.cmpi ne, %1, %c0_i32_0 : i32
    scf.if %2 {
      %c0_23 = arith.constant 0 : index
      %c0_24 = arith.constant 0 : index
      %47 = vector.load %arg2[%c0_23, %c0_24] : memref<2x128xf32, #tpu.memory_space<vmem>>, vector<2x128xf32>
      %c0_25 = arith.constant 0 : index
      %c0_26 = arith.constant 0 : index
      %48 = vector.load %arg7[%c0_25, %c0_26] : memref<2x128xf32, #tpu.memory_space<vmem>>, vector<2x128xf32>
      tpu.vector_store %arg7[%c0_25, %c0_26], %47 {strides = array<i32>} : memref<2x128xf32, #tpu.memory_space<vmem>>, vector<2x128xf32>,
      %c0_27 = arith.constant 0 : index
      %c0_28 = arith.constant 0 : index
      %49 = vector.load %arg3[%c0_27, %c0_28] : memref<2x128xf32, #tpu.memory_space<vmem>>, vector<2x128xf32>
      %c0_29 = arith.constant 0 : index
      %c0_30 = arith.constant 0 : index
      %50 = vector.load %arg8[%c0_29, %c0_30] : memref<2x128xf32, #tpu.memory_space<vmem>>, vector<2x128xf32>
      tpu.vector_store %arg8[%c0_29, %c0_30], %49 {strides = array<i32>} : memref<2x128xf32, #tpu.memory_space<vmem>>, vector<2x128xf32>,
    } else {
    }
    %c0 = arith.constant 0 : index
    %c0_1 = arith.constant 0 : index
    %c0_2 = arith.constant 0 : index
    %3 = vector.load %arg1[%c0, %c0_1, %c0_2] : memref<1x2x640xf32, #tpu.memory_space<vmem>>, vector<1x2x640xf32>
    %4 = vector.shape_cast %3 : vector<1x2x640xf32> to vector<2x640xf32>
    %c0_3 = arith.constant 0 : index
    %c0_4 = arith.constant 0 : index
    %5 = vector.load %arg7[%c0_3, %c0_4] : memref<2x128xf32, #tpu.memory_space<vmem>>, vector<2x128xf32>
    %c0_5 = arith.constant 0 : index
    %c0_6 = arith.constant 0 : index
    %6 = vector.load %arg4[%c0_5, %c0_6] : memref<128x640xf32, #tpu.memory_space<vmem>>, vector<128x640xf32>
    %cst = arith.constant dense<0.000000e+00> : vector<2x640xf32>
    %7 = tpu.matmul %5, %6, %cst {dimension_numbers = #tpu.dot_dimension_numbers<[1], [0], [0], [1], [0, 0, 1, 1], [], []>} : vector<2x128xf32>, vector<128x640xf32>, vector<2x640xf32> -> vector<2x640xf32>
    %8 = arith.addf %4, %7 : vector<2x640xf32>
    %9 = vector.extract_strided_slice %8 {offsets = [0, 0], sizes = [2, 128], strides = [1, 1]} : vector<2x640xf32> to vector<2x128xf32>
    %cst_7 = arith.constant 0.000000e+00 : f32
    %10 = vector.broadcast %cst_7 : f32 to vector<2x128xf32>
    %11 = arith.subf %10, %9 : vector<2x128xf32>
    %12 = math.exp %11 : vector<2x128xf32>
    %cst_8 = arith.constant 1.000000e+00 : f32
    %13 = vector.broadcast %cst_8 : f32 to vector<2x128xf32>
    %14 = arith.addf %13, %12 : vector<2x128xf32>
    %15 = tpu.reciprocal %14 {approx = true} : vector<2x128xf32> -> vector<2x128xf32>
    %16 = vector.extract_strided_slice %8 {offsets = [0, 128], sizes = [2, 128], strides = [1, 1]} : vector<2x640xf32> to vector<2x128xf32>
    %cst_9 = arith.constant 0.000000e+00 : f32
    %17 = vector.broadcast %cst_9 : f32 to vector<2x128xf32>
    %18 = arith.subf %17, %16 : vector<2x128xf32>
    %19 = math.exp %18 : vector<2x128xf32>
    %cst_10 = arith.constant 1.000000e+00 : f32
    %20 = vector.broadcast %cst_10 : f32 to vector<2x128xf32>
    %21 = arith.addf %20, %19 : vector<2x128xf32>
    %22 = tpu.reciprocal %21 {approx = true} : vector<2x128xf32> -> vector<2x128xf32>
    %23 = vector.extract_strided_slice %8 {offsets = [0, 256], sizes = [2, 128], strides = [1, 1]} : vector<2x640xf32> to vector<2x128xf32>
    %cst_11 = arith.constant 0.000000e+00 : f32
    %24 = vector.broadcast %cst_11 : f32 to vector<2x128xf32>
    %25 = arith.subf %24, %23 : vector<2x128xf32>
    %26 = math.exp %25 : vector<2x128xf32>
    %cst_12 = arith.constant 1.000000e+00 : f32
    %27 = vector.broadcast %cst_12 : f32 to vector<2x128xf32>
    %28 = arith.addf %27, %26 : vector<2x128xf32>
    %29 = tpu.reciprocal %28 {approx = true} : vector<2x128xf32> -> vector<2x128xf32>
    %30 = vector.extract_strided_slice %8 {offsets = [0, 384], sizes = [2, 128], strides = [1, 1]} : vector<2x640xf32> to vector<2x128xf32>
    %31 = vector.extract_strided_slice %8 {offsets = [0, 512], sizes = [2, 128], strides = [1, 1]} : vector<2x640xf32> to vector<2x128xf32>
    %32 = arith.maximumf %30, %31 : vector<2x128xf32>
    %c0_13 = arith.constant 0 : index
    %c0_14 = arith.constant 0 : index
    %33 = vector.load %arg8[%c0_13, %c0_14] : memref<2x128xf32, #tpu.memory_space<vmem>>, vector<2x128xf32>
    %34 = arith.mulf %22, %33 : vector<2x128xf32>
    %35 = arith.mulf %15, %32 : vector<2x128xf32>
    %36 = arith.addf %34, %35 : vector<2x128xf32>
    %37 = math.tanh %36 : vector<2x128xf32>
    %38 = arith.mulf %29, %37 : vector<2x128xf32>
    %c0_15 = arith.constant 0 : index
    %c0_16 = arith.constant 0 : index
    %39 = vector.load %arg8[%c0_15, %c0_16] : memref<2x128xf32, #tpu.memory_space<vmem>>, vector<2x128xf32>
    tpu.vector_store %arg8[%c0_15, %c0_16], %36 {strides = array<i32>} : memref<2x128xf32, #tpu.memory_space<vmem>>, vector<2x128xf32>,
    %c0_17 = arith.constant 0 : index
    %c0_18 = arith.constant 0 : index
    %40 = vector.load %arg7[%c0_17, %c0_18] : memref<2x128xf32, #tpu.memory_space<vmem>>, vector<2x128xf32>
    tpu.vector_store %arg7[%c0_17, %c0_18], %38 {strides = array<i32>} : memref<2x128xf32, #tpu.memory_space<vmem>>, vector<2x128xf32>,
    %c0_19 = arith.constant 0 : index
    %c0_20 = arith.constant 0 : index
    %c0_21 = arith.constant 0 : index
    %41 = vector.load %arg5[%c0_19, %c0_20, %c0_21] : memref<1x2x128xf32, #tpu.memory_space<vmem>>, vector<1x2x128xf32>
    %42 = vector.shape_cast %41 : vector<1x2x128xf32> to vector<2x128xf32>
    %43 = vector.shape_cast %38 : vector<2x128xf32> to vector<1x2x128xf32>
    tpu.vector_store %arg5[%c0_19, %c0_20, %c0_21], %43 {strides = array<i32>} : memref<1x2x128xf32, #tpu.memory_space<vmem>>, vector<1x2x128xf32>,
    %c7_i32 = arith.constant 7 : i32
    %44 = arith.cmpi eq, %arg0, %c7_i32 : i32
    %45 = arith.extui %44 : i1 to i32
    %c0_i32_22 = arith.constant 0 : i32
    %46 = arith.cmpi ne, %45, %c0_i32_22 : i32
    scf.if %46 {
      %c0_23 = arith.constant 0 : index
      %c0_24 = arith.constant 0 : index
      %47 = vector.load %arg6[%c0_23, %c0_24] : memref<2x128xf32, #tpu.memory_space<vmem>>, vector<2x128xf32>
      tpu.vector_store %arg6[%c0_23, %c0_24], %36 {strides = array<i32>} : memref<2x128xf32, #tpu.memory_space<vmem>>, vector<2x128xf32>,
    } else {
    }
    return
  }
  func.func @transform_0(%arg0: i32) -> (i32, i32, i32) {
    %c0_i32 = arith.constant 0 : i32
    %c0_i32_0 = arith.constant 0 : i32
    %c0_i32_1 = arith.constant 0 : i32
    return %arg0, %c0_i32, %c0_i32_0 : i32, i32, i32
  }
  func.func @transform_1(%arg0: i32) -> (i32, i32) {
    %c0_i32 = arith.constant 0 : i32
    %c0_i32_0 = arith.constant 0 : i32
    %c0_i32_1 = arith.constant 0 : i32
    return %c0_i32, %c0_i32_0 : i32, i32
  }
  func.func @transform_2(%arg0: i32) -> (i32, i32) {
    %c0_i32 = arith.constant 0 : i32
    %c0_i32_0 = arith.constant 0 : i32
    %c0_i32_1 = arith.constant 0 : i32
    return %c0_i32, %c0_i32_0 : i32, i32
  }
  func.func @transform_3(%arg0: i32) -> (i32, i32) {
    %c0_i32 = arith.constant 0 : i32
    %c0_i32_0 = arith.constant 0 : i32
    %c0_i32_1 = arith.constant 0 : i32
    return %c0_i32, %c0_i32_0 : i32, i32
  }
  func.func @transform_4(%arg0: i32) -> (i32, i32, i32) {
    %c0_i32 = arith.constant 0 : i32
    %c0_i32_0 = arith.constant 0 : i32
    %c0_i32_1 = arith.constant 0 : i32
    return %arg0, %c0_i32, %c0_i32_0 : i32, i32, i32
  }
  func.func @transform_5(%arg0: i32) -> (i32, i32) {
    %c0_i32 = arith.constant 0 : i32
    %c0_i32_0 = arith.constant 0 : i32
    %c0_i32_1 = arith.constant 0 : i32
    return %c0_i32, %c0_i32_0 : i32, i32
  }
}

</mosaic_0001>

<llo_original>
// kernel: tpu_custom_call.1
$region0: #{tpu_custom_call.1}
  #allocation0 [shape = 'u32[]', space=smem, size = 0x4, offset = 0x4, fixed_abs, tag = 'smem constant byte address 0x4 - core index']
  #allocation1 [shape = 'u32[144,128]{1,0:T(1,128)}', space=vmem, size = 0x12000, scoped, tag = 'internal scratch']
  #allocation2 [shape = 'f32[2,128]{1,0:T(2,128)}', space=vmem, size = 0x400, scoped, tag = 'scratch operand']
  #allocation3 [shape = 'f32[2,128]{1,0:T(2,128)}', space=vmem, size = 0x400, scoped, tag = 'scratch operand']
  %s0 = inlined_call_operand.hbm [shape: f32[8,2,640], index: 0, kind: input, shape index: {}]
  %s1 = inlined_call_operand.hbm [shape: f32[2,128], index: 1, kind: input, shape index: {}]
  %s2 = inlined_call_operand.vmem [shape: f32[2,128], index: 2, kind: input, shape index: {}]
  %s3 = inlined_call_operand.hbm [shape: f32[128,640], index: 3, kind: input, shape index: {}]
  %s4 = inlined_call_operand.hbm [shape: f32[8,2,128], index: 4, kind: output, shape index: {0}]
  %s5 = inlined_call_operand.hbm [shape: f32[2,128], index: 5, kind: output, shape index: {1}]
  %6 = xla_tuple %s4, %s5
  %s7 = sld [smem:[#allocation0]]
  $region77: #{tpu_custom_call.1} parent=0
    _
  %s9 = ssub.s32 1, %s7
  %s10 = scalar_select 0, %s9, %s7
  $region1: #{tpu_custom_call.1} parent=0
    #allocation4 [shape = 'u8[10240]{0}', space=vmem, size = 0x2800, scoped, tag = 'input window, operand 0']
    #allocation5 [shape = 's32[2]{0}', space=sflag, size = 0x8, scoped, tag = 'scoped memory for tpu_custom_call.1']
    #allocation6 [shape = 's32[2]{0}', space=sflag, size = 0x8, scoped, tag = 'scoped memory for tpu_custom_call.1']
    #allocation7 [shape = 'u8[1024]{0}', space=vmem, size = 0x400, scoped, tag = 'input window, operand 1, single buffered']
    #allocation8 [shape = 's32[1]{0}', space=sflag, size = 0x4, scoped, tag = 'scoped memory for tpu_custom_call.1']
    #allocation9 [shape = 'u8[327680]{0}', space=vmem, size = 0x50000, scoped, tag = 'input window, operand 3, single buffered']
    #allocation10 [shape = 'u8[2048]{0}', space=vmem, size = 0x800, scoped, tag = 'output window, operand 0']
    #allocation11 [shape = 'u8[1024]{0}', space=vmem, size = 0x400, scoped, tag = 'output window, operand 1, single buffered']
    #allocation12 [shape = 's32[1]{0}', space=sflag, size = 0x4, scoped, tag = 'scoped memory for tpu_custom_call.1']
    %11 = vsyncpa [#allocation5], 0
    %s12 = scalar_lea.sflag [#allocation5], 1
    %13 = vsyncpa %s12, 0
    %14 = vsyncpa [#allocation8], 0
    %15 = vsyncpa [#allocation6], 0
    %s16 = scalar_lea.sflag [#allocation6], 1
    %17 = vsyncpa %s16, 0
    %18 = vsyncpa [#allocation12], 0
    loop: start=0, step=1, limit=10
    $region2: #{tpu_custom_call.1} parent=1 // loop_pre_header
      _
    $region3: #{tpu_custom_call.1} parent=1 // loop_header
      %s20 = sphi 0, %s24
      %p21 = scmp.ge.s32.totalorder %s20, 10
      %s30 = sphi 0, %s32
      %s33 = sphi 0, %s30
      %s34 = sphi 0, %s33
      %s50 = sphi 0, %s34
      %s54 = sphi 0, %s54
      %s56 = sphi 0, %s54
      %s57 = sphi 0, %s56
      %s71 = sphi 0, %s57
      %s75 = sphi 0, %s75
      %s77 = sphi 0, %s75
      %s78 = sphi 0, %s77
      %s92 = sphi 0, %s78
      %s96 = sphi 0, %s96
      %s98 = sphi 0, %s96
      %s99 = sphi 0, %s98
      %s113 = sphi 0, %s99
      %s119 = sphi 0, %s121
      %s122 = sphi 0, %s119
      %s123 = sphi 0, %s122
      %s139 = sphi 0, %s123
      %s143 = sphi 0, %s143
      %s145 = sphi 0, %s143
      %s146 = sphi 0, %s145
      %s160 = sphi 0, %s146
    $region4: #{tpu_custom_call.1} parent=1 // loop_header_branch
      %23 = sbr.rel (%p21) target = $region8
    $region5: #{tpu_custom_call.1} parent=1 // loop_body
      %s25 = ssub.s32 %s20, 1
      %s26 = ssub.s32 %s20, 2
      %s27 = sadd.s32 %s20, 1
      %s28 = ssub.s32 %s20, %s27
      %p29 = scmp.eq.s32.totalorder %s28, 0
      %s31 = sadd.s32 %s30, 1
      %s32 = scalar_select %p29, %s30, %s31
      %p35 = pneg %p29
      %p36 = scmp.eq.s32.totalorder %s20, 7
      %p37 = por %p35, %p36
      %p38 = scmp.ne.s32.totalorder %s30, %s33
      %p39 = scmp.eq.s32.totalorder %s20, 0
      %p40 = por %p38, %p39
      %p41 = scmp.ne.s32.totalorder %s30, %s33
      %p42 = scmp.eq.s32.totalorder %s25, 7
      %p43 = por %p41, %p42
      %p44 = scmp.ne.s32.totalorder %s33, %s34
      %p45 = scmp.eq.s32.totalorder %s25, 0
      %p46 = por %p44, %p45
      %p47 = scmp.ne.s32.totalorder %s33, %s34
      %p48 = scmp.eq.s32.totalorder %s26, 7
      %p49 = por %p47, %p48
      %p51 = scmp.ne.s32.totalorder %s34, %s50
      %p52 = scmp.eq.s32.totalorder %s26, 0
      %p53 = por %p51, %p52
      %s55 = sadd.s32 %s54, 1
      %p58 = scmp.eq.s32.totalorder %s20, 7
      %p59 = scmp.ne.s32.totalorder %s54, %s56
      %p60 = scmp.eq.s32.totalorder %s20, 0
      %p61 = por %p59, %p60
      %p62 = scmp.ne.s32.totalorder %s54, %s56
      %p63 = scmp.eq.s32.totalorder %s25, 7
      %p64 = por %p62, %p63
      %p65 = scmp.ne.s32.totalorder %s56, %s57
      %p66 = scmp.eq.s32.totalorder %s25, 0
      %p67 = por %p65, %p66
      %p68 = scmp.ne.s32.totalorder %s56, %s57
      %p69 = scmp.eq.s32.totalorder %s26, 7
      %p70 = por %p68, %p69
      %p72 = scmp.ne.s32.totalorder %s57, %s71
      %p73 = scmp.eq.s32.totalorder %s26, 0
      %p74 = por %p72, %p73
      %s76 = sadd.s32 %s75, 1
      %p79 = scmp.eq.s32.totalorder %s20, 7
      %p80 = scmp.ne.s32.totalorder %s75, %s77
      %p81 = scmp.eq.s32.totalorder %s20, 0
      %p82 = por %p80, %p81
      %p83 = scmp.ne.s32.totalorder %s75, %s77
      %p84 = scmp.eq.s32.totalorder %s25, 7
      %p85 = por %p83, %p84
      %p86 = scmp.ne.s32.totalorder %s77, %s78
      %p87 = scmp.eq.s32.totalorder %s25, 0
      %p88 = por %p86, %p87
      %p89 = scmp.ne.s32.totalorder %s77, %s78
      %p90 = scmp.eq.s32.totalorder %s26, 7
      %p91 = por %p89, %p90
      %p93 = scmp.ne.s32.totalorder %s78, %s92
      %p94 = scmp.eq.s32.totalorder %s26, 0
      %p95 = por %p93, %p94
      %s97 = sadd.s32 %s96, 1
      %p100 = scmp.eq.s32.totalorder %s20, 7
      %p101 = scmp.ne.s32.totalorder %s96, %s98
      %p102 = scmp.eq.s32.totalorder %s20, 0
      %p103 = por %p101, %p102
      %p104 = scmp.ne.s32.totalorder %s96, %s98
      %p105 = scmp.eq.s32.totalorder %s25, 7
      %p106 = por %p104, %p105
      %p107 = scmp.ne.s32.totalorder %s98, %s99
      %p108 = scmp.eq.s32.totalorder %s25, 0
      %p109 = por %p107, %p108
      %p110 = scmp.ne.s32.totalorder %s98, %s99
      %p111 = scmp.eq.s32.totalorder %s26, 7
      %p112 = por %p110, %p111
      %p114 = scmp.ne.s32.totalorder %s99, %s113
      %p115 = scmp.eq.s32.totalorder %s26, 0
      %p116 = por %p114, %p115
      %s117 = ssub.s32 %s20, %s27
      %p118 = scmp.eq.s32.totalorder %s117, 0
      %s120 = sadd.s32 %s119, 1
      %s121 = scalar_select %p118, %s119, %s120
      %p124 = pneg %p118
      %p125 = scmp.eq.s32.totalorder %s20, 7
      %p126 = por %p124, %p125
      %p127 = scmp.ne.s32.totalorder %s119, %s122
      %p128 = scmp.eq.s32.totalorder %s20, 0
      %p129 = por %p127, %p128
      %p130 = scmp.ne.s32.totalorder %s119, %s122
      %p131 = scmp.eq.s32.totalorder %s25, 7
      %p132 = por %p130, %p131
      %p133 = scmp.ne.s32.totalorder %s122, %s123
      %p134 = scmp.eq.s32.totalorder %s25, 0
      %p135 = por %p133, %p134
      %p136 = scmp.ne.s32.totalorder %s122, %s123
      %p137 = scmp.eq.s32.totalorder %s26, 7
      %p138 = por %p136, %p137
      %p140 = scmp.ne.s32.totalorder %s123, %s139
      %p141 = scmp.eq.s32.totalorder %s26, 0
      %p142 = por %p140, %p141
      %s144 = sadd.s32 %s143, 1
      %p147 = scmp.eq.s32.totalorder %s20, 7
      %p148 = scmp.ne.s32.totalorder %s143, %s145
      %p149 = scmp.eq.s32.totalorder %s20, 0
      %p150 = por %p148, %p149
      %p151 = scmp.ne.s32.totalorder %s143, %s145
      %p152 = scmp.eq.s32.totalorder %s25, 7
      %p153 = por %p151, %p152
      %p154 = scmp.ne.s32.totalorder %s145, %s146
      %p155 = scmp.eq.s32.totalorder %s25, 0
      %p156 = por %p154, %p155
      %p157 = scmp.ne.s32.totalorder %s145, %s146
      %p158 = scmp.eq.s32.totalorder %s26, 7
      %p159 = por %p157, %p158
      %p161 = scmp.ne.s32.totalorder %s146, %s160
      %p162 = scmp.eq.s32.totalorder %s26, 0
      %p163 = por %p161, %p162
      %p164 = scmp.le.s32.totalorder 1, %s20
      %p165 = scmp.lt.s32.totalorder %s20, 9
      %p166 = pnand %p164, %p165
      %p167 = pneg %p166
      // Predicated region
      $region9: #{tpu_custom_call.1} parent=5 // pred_check
        _
      $region10: #{tpu_custom_call.1} parent=5 // pred_check_branch
        %169 = sbr.rel (%p166) target = $region12
      $region11: #{tpu_custom_call.1} parent=5 // pred_region
        %s170 = ssub.s32 %s20, 1
        // Predicated region
        $region13: #{tpu_custom_call.1} parent=11 // pred_check
          %p171 = pneg %p67
        $region14: #{tpu_custom_call.1} parent=11 // pred_check_branch
          %173 = sbr.rel (%p171) target = $region16
        $region15: #{tpu_custom_call.1} parent=11 // pred_region
          %s175 = ssub.s32 32, 32
          %176 = vsyncadd [#allocation8], %s175
          %s178 = sshll.u32 [#allocation7], 4
          %s179 = int_to_ptr.vmem [resolvable:$true] %s178
          %181 = dma.hbm_to_vmem [thread:$0]  %s1, 32, %s179, [#allocation8]
        $region16: #{tpu_custom_call.1} parent=11 // pred_fallthru
          _
        // Predicated region
        $region17: #{tpu_custom_call.1} parent=11 // pred_check
          %p182 = pneg %p88
        $region18: #{tpu_custom_call.1} parent=11 // pred_check_branch
          %184 = sbr.rel (%p182) target = $region20
        $region19: #{tpu_custom_call.1} parent=11 // pred_region
          _
        $region20: #{tpu_custom_call.1} parent=11 // pred_fallthru
          _
        // Predicated region
        $region21: #{tpu_custom_call.1} parent=11 // pred_check
          %p185 = pneg %p109
        $region22: #{tpu_custom_call.1} parent=11 // pred_check_branch
          %187 = sbr.rel (%p185) target = $region24
        $region23: #{tpu_custom_call.1} parent=11 // pred_region
          %s189 = ssub.s32 10240, 10240
          %190 = vsyncadd [#allocation8], %s189
          %s191 = sshll.u32 [#allocation9], 4
          %s192 = int_to_ptr.vmem [resolvable:$true] %s191
          %197 = dma.hbm_to_vmem [thread:$0]  %s3, 10240, %s192, [#allocation8], 640, 640, 40
        $region24: #{tpu_custom_call.1} parent=11 // pred_fallthru
          _
      $region12: #{tpu_custom_call.1} parent=5 // pred_fallthru
        _
      %p198 = scmp.lt.s32.totalorder %s20, 8
      // Predicated region
      $region25: #{tpu_custom_call.1} parent=5 // pred_check
        %p199 = pneg %p198
      $region26: #{tpu_custom_call.1} parent=5 // pred_check_branch
        %201 = sbr.rel (%p199) target = $region28
      $region27: #{tpu_custom_call.1} parent=5 // pred_region
        // Predicated region
        $region29: #{tpu_custom_call.1} parent=27 // pred_check
          %p202 = pneg %p40
        $region30: #{tpu_custom_call.1} parent=27 // pred_check_branch
          %204 = sbr.rel (%p202) target = $region32
        $region31: #{tpu_custom_call.1} parent=27 // pred_region
          %s205 = sand.u32 %s30, 1
          %s206 = scalar_lea.sflag [#allocation5], %s205
          %s207 = sand.u32 %s30, 1
          %s208 = smul.addr %s207, 10
          %s209 = scalar_lea.vmem [#allocation4], %s208
          %s211 = ssub.s32 160, 160
          %212 = vsyncadd %s206, %s211
          %s213 = smul.addr %s20, 5
          %s214 = smul.addr %s213, 32
          %s215 = scalar_lea.hbm %s0, %s214
          %s217 = sshll.u32 %s209, 4
          %s218 = int_to_ptr.vmem [resolvable:$true] %s217
          %220 = dma.hbm_to_vmem [thread:$0]  %s215, 160, %s218, %s206
        $region32: #{tpu_custom_call.1} parent=27 // pred_fallthru
          _
      $region28: #{tpu_custom_call.1} parent=5 // pred_fallthru
        _
      %p221 = scmp.le.s32.totalorder 1, %s20
      %p222 = scmp.lt.s32.totalorder %s20, 9
      %p223 = pnand %p221, %p222
      %p224 = pneg %p223
      // Predicated region
      $region33: #{tpu_custom_call.1} parent=5 // pred_check
        _
      $region34: #{tpu_custom_call.1} parent=5 // pred_check_branch
        %226 = sbr.rel (%p223) target = $region36
      $region35: #{tpu_custom_call.1} parent=5 // pred_region
        %s227 = ssub.s32 %s20, 1
        %s228 = sand.u32 %s33, 1
        %s229 = scalar_lea.sflag [#allocation5], %s228
        %s230 = sand.u32 %s33, 1
        %s231 = smul.addr %s230, 10
        %s232 = scalar_lea.vmem [#allocation4], %s231
        // Predicated region
        $region37: #{tpu_custom_call.1} parent=35 // pred_check
          %p233 = pneg %p46
        $region38: #{tpu_custom_call.1} parent=35 // pred_check_branch
          %235 = sbr.rel (%p233) target = $region40
        $region39: #{tpu_custom_call.1} parent=35 // pred_region
          %236 = dma.done %s229, 160
        $region40: #{tpu_custom_call.1} parent=35 // pred_fallthru
          _
        // Predicated region
        $region41: #{tpu_custom_call.1} parent=35 // pred_check
          %p237 = pneg %p67
        $region42: #{tpu_custom_call.1} parent=35 // pred_check_branch
          %239 = sbr.rel (%p237) target = $region44
        $region43: #{tpu_custom_call.1} parent=35 // pred_region
          %240 = dma.done [#allocation8], 32
        $region44: #{tpu_custom_call.1} parent=35 // pred_fallthru
          _
        // Predicated region
        $region45: #{tpu_custom_call.1} parent=35 // pred_check
          %p241 = pneg %p109
        $region46: #{tpu_custom_call.1} parent=35 // pred_check_branch
          %243 = sbr.rel (%p241) target = $region48
        $region47: #{tpu_custom_call.1} parent=35 // pred_region
          %244 = dma.done [#allocation8], 10240
        $region48: #{tpu_custom_call.1} parent=35 // pred_fallthru
          _
        %s245 = sand.u32 %s33, 1
        %s246 = scalar_lea.sflag [#allocation5], %s245
        %s247 = sand.u32 %s33, 1
        %s248 = smul.addr %s247, 10
        %s249 = scalar_lea.vmem [#allocation4], %s248
        %p250 = pneg %p46
        %p251 = pneg %p43
        %p252 = pneg %p67
        %p253 = pneg %p64
        %p254 = pneg %p88
        %p255 = pneg %p85
        %p256 = pneg %p109
        %p257 = pneg %p106
        %p258 = pneg %p135
        %p259 = pneg %p132
        %s260 = sand.u32 %s122, 1
        %s261 = scalar_lea.sflag [#allocation6], %s260
        %s262 = sand.u32 %s122, 1
        %s263 = smul.addr %s262, 2
        %s264 = scalar_lea.vmem [#allocation10], %s263
        %p265 = pneg %p156
        %p266 = pneg %p153
        %p267 = scmp.eq.s32.totalorder %s25, 0
        // Predicated region
        $region49: #{tpu_custom_call.1} parent=35 // pred_check
          %p268 = pneg %p267
        $region50: #{tpu_custom_call.1} parent=35 // pred_check_branch
          %270 = sbr.rel (%p268) target = $region52
        $region51: #{tpu_custom_call.1} parent=35 // pred_region
          %v271 = vld [vmem:[#allocation7] sm:$0x3]
          %272 = vst [vmem:[#allocation2] sm:$0x3] %v271
          %v273 = vld [vmem:[%s2] sm:$0x3]
          %274 = vst [vmem:[#allocation3] sm:$0x3] %v273
        $region52: #{tpu_custom_call.1} parent=35 // pred_fallthru
          _
        %v275 = vld [vmem:[%s232] sm:$0xff]
        %v276 = vld [vmem:[%s232 + $0x8] sm:$0x3]
        %v277 = vld [vmem:[#allocation2] sm:$0x3]
        %v278 = vld [vmem:[#allocation9] sm:$0xff]
        %v279 = vld [vmem:[#allocation9 + $0x8] sm:$0xff]
        %v280 = vld [vmem:[#allocation9 + $0x10] sm:$0xff]
        %v281 = vld [vmem:[#allocation9 + $0x18] sm:$0xff]
        %v282 = vld [vmem:[#allocation9 + $0x20] sm:$0xff]
        %v283 = vld [vmem:[#allocation9 + $0x28] sm:$0xff]
        %v284 = vld [vmem:[#allocation9 + $0x30] sm:$0xff]
        %v285 = vld [vmem:[#allocation9 + $0x38] sm:$0xff]
        %v286 = vld [vmem:[#allocation9 + $0x40] sm:$0xff]
        %v287 = vld [vmem:[#allocation9 + $0x48] sm:$0xff]
        %v288 = vld [vmem:[#allocation9 + $0x50] sm:$0xff]
        %v289 = vld [vmem:[#allocation9 + $0x58] sm:$0xff]
        %v290 = vld [vmem:[#allocation9 + $0x60] sm:$0xff]
        %v291 = vld [vmem:[#allocation9 + $0x68] sm:$0xff]
        %v292 = vld [vmem:[#allocation9 + $0x70] sm:$0xff]
        %v293 = vld [vmem:[#allocation9 + $0x78] sm:$0xff]
        %v294 = vld [vmem:[#allocation9 + $0x80] sm:$0xff]
        %v295 = vld [vmem:[#allocation9 + $0x88] sm:$0xff]
        %v296 = vld [vmem:[#allocation9 + $0x90] sm:$0xff]
        %v297 = vld [vmem:[#allocation9 + $0x98] sm:$0xff]
        %v298 = vld [vmem:[#allocation9 + $0xa0] sm:$0xff]
        %v299 = vld [vmem:[#allocation9 + $0xa8] sm:$0xff]
        %v300 = vld [vmem:[#allocation9 + $0xb0] sm:$0xff]
        %v301 = vld [vmem:[#allocation9 + $0xb8] sm:$0xff]
        %v302 = vld [vmem:[#allocation9 + $0xc0] sm:$0xff]
        %v303 = vld [vmem:[#allocation9 + $0xc8] sm:$0xff]
        %v304 = vld [vmem:[#allocation9 + $0xd0] sm:$0xff]
        %v305 = vld [vmem:[#allocation9 + $0xd8] sm:$0xff]
        %v306 = vld [vmem:[#allocation9 + $0xe0] sm:$0xff]
        %v307 = vld [vmem:[#allocation9 + $0xe8] sm:$0xff]
        %v308 = vld [vmem:[#allocation9 + $0xf0] sm:$0xff]
        %v309 = vld [vmem:[#allocation9 + $0xf8] sm:$0xff]
        %v310 = vld [vmem:[#allocation9 + $0x100] sm:$0xff]
        %v311 = vld [vmem:[#allocation9 + $0x108] sm:$0xff]
        %v312 = vld [vmem:[#allocation9 + $0x110] sm:$0xff]
        %v313 = vld [vmem:[#allocation9 + $0x118] sm:$0xff]
        %v314 = vld [vmem:[#allocation9 + $0x120] sm:$0xff]
        %v315 = vld [vmem:[#allocation9 + $0x128] sm:$0xff]
        %v316 = vld [vmem:[#allocation9 + $0x130] sm:$0xff]
        %v317 = vld [vmem:[#allocation9 + $0x138] sm:$0xff]
        %v318 = vld [vmem:[#allocation9 + $0x140] sm:$0xff]
        %v319 = vld [vmem:[#allocation9 + $0x148] sm:$0xff]
        %v320 = vld [vmem:[#allocation9 + $0x150] sm:$0xff]
        %v321 = vld [vmem:[#allocation9 + $0x158] sm:$0xff]
        %v322 = vld [vmem:[#allocation9 + $0x160] sm:$0xff]
        %v323 = vld [vmem:[#allocation9 + $0x168] sm:$0xff]
        %v324 = vld [vmem:[#allocation9 + $0x170] sm:$0xff]
        %v325 = vld [vmem:[#allocation9 + $0x178] sm:$0xff]
        %v326 = vld [vmem:[#allocation9 + $0x180] sm:$0xff]
        %v327 = vld [vmem:[#allocation9 + $0x188] sm:$0xff]
        %v328 = vld [vmem:[#allocation9 + $0x190] sm:$0xff]
        %v329 = vld [vmem:[#allocation9 + $0x198] sm:$0xff]
        %v330 = vld [vmem:[#allocation9 + $0x1a0] sm:$0xff]
        %v331 = vld [vmem:[#allocation9 + $0x1a8] sm:$0xff]
        %v332 = vld [vmem:[#allocation9 + $0x1b0] sm:$0xff]
        %v333 = vld [vmem:[#allocation9 + $0x1b8] sm:$0xff]
        %v334 = vld [vmem:[#allocation9 + $0x1c0] sm:$0xff]
        %v335 = vld [vmem:[#allocation9 + $0x1c8] sm:$0xff]
        %v336 = vld [vmem:[#allocation9 + $0x1d0] sm:$0xff]
        %v337 = vld [vmem:[#allocation9 + $0x1d8] sm:$0xff]
        %v338 = vld [vmem:[#allocation9 + $0x1e0] sm:$0xff]
        %v339 = vld [vmem:[#allocation9 + $0x1e8] sm:$0xff]
        %v340 = vld [vmem:[#allocation9 + $0x1f0] sm:$0xff]
        %v341 = vld [vmem:[#allocation9 + $0x1f8] sm:$0xff]
        %v342 = vld [vmem:[#allocation9 + $0x200] sm:$0xff]
        %v343 = vld [vmem:[#allocation9 + $0x208] sm:$0xff]
        %v344 = vld [vmem:[#allocation9 + $0x210] sm:$0xff]
        %v345 = vld [vmem:[#allocation9 + $0x218] sm:$0xff]
        %v346 = vld [vmem:[#allocation9 + $0x220] sm:$0xff]
        %v347 = vld [vmem:[#allocation9 + $0x228] sm:$0xff]
        %v348 = vld [vmem:[#allocation9 + $0x230] sm:$0xff]
        %v349 = vld [vmem:[#allocation9 + $0x238] sm:$0xff]
        %v350 = vld [vmem:[#allocation9 + $0x240] sm:$0xff]
        %v351 = vld [vmem:[#allocation9 + $0x248] sm:$0xff]
        %v352 = vld [vmem:[#allocation9 + $0x250] sm:$0xff]
        %v353 = vld [vmem:[#allocation9 + $0x258] sm:$0xff]
        %v354 = vld [vmem:[#allocation9 + $0x260] sm:$0xff]
        %v355 = vld [vmem:[#allocation9 + $0x268] sm:$0xff]
        %v356 = vld [vmem:[#allocation9 + $0x270] sm:$0xff]
        %v357 = vld [vmem:[#allocation9 + $0x278] sm:$0xff]
        %358 = vmatprep.subr.mxu0 %v354
        %359 = vmatpush1.msra.mxu0 %v353
        %360 = vmatprep.subr.mxu0 %v349
        %361 = vmatpush1.msra.mxu0 %v348
        %362 = vmatprep.subr.mxu0 %v344
        %363 = vmatpush1.msra.mxu0 %v343
        %364 = vmatprep.subr.mxu0 %v339
        %365 = vmatpush1.msra.mxu0 %v338
        %366 = vmatprep.subr.mxu0 %v334
        %367 = vmatpush1.msra.mxu0 %v333
        %368 = vmatprep.subr.mxu0 %v329
        %369 = vmatpush1.msra.mxu0 %v328
        %370 = vmatprep.subr.mxu0 %v324
        %371 = vmatpush1.msra.mxu0 %v323
        %372 = vmatprep.subr.mxu0 %v319
        %373 = vmatpush1.msra.mxu0 %v318
        %374 = vmatprep.subr.mxu0 %v314
        %375 = vmatpush1.msra.mxu0 %v313
        %376 = vmatprep.subr.mxu0 %v309
        %377 = vmatpush1.msra.mxu0 %v308
        %378 = vmatprep.subr.mxu0 %v304
        %379 = vmatpush1.msra.mxu0 %v303
        %380 = vmatprep.subr.mxu0 %v299
        %381 = vmatpush1.msra.mxu0 %v298
        %382 = vmatprep.subr.mxu0 %v294
        %383 = vmatpush1.msra.mxu0 %v293
        %384 = vmatprep.subr.mxu0 %v289
        %385 = vmatpush1.msra.mxu0 %v288
        %386 = vmatprep.subr.mxu0 %v284
        %387 = vmatpush1.msra.mxu0 %v283
        %388 = vmatprep.subr.mxu0 %v279
        %389 = vmatpush1.msra.mxu0 %v278
        %390 = vmatprep.subr.mxu0 0.0
        %391 = vmatpush2.msra.mxu0 0.0
        %392 = vmatprep.subr.mxu0 0.0
        %393 = vmatpush2.msra.mxu0 0.0
        %394 = vmatprep.subr.mxu0 0.0
        %395 = vmatpush2.msra.mxu0 0.0
        %396 = vmatprep.subr.mxu0 0.0
        %397 = vmatpush2.msra.mxu0 0.0
        %398 = vmatprep.subr.mxu0 0.0
        %399 = vmatpush2.msra.mxu0 0.0
        %400 = vmatprep.subr.mxu0 0.0
        %401 = vmatpush2.msra.mxu0 0.0
        %402 = vmatprep.subr.mxu0 0.0
        %403 = vmatpush2.msra.mxu0 0.0
        %404 = vmatprep.subr.mxu0 0.0
        %405 = vmatpush2.msra.mxu0 0.0
        %406 = vmatprep.subr.mxu0 0.0
        %407 = vmatpush2.msra.mxu0 0.0
        %408 = vmatprep.subr.mxu0 0.0
        %409 = vmatpush2.msra.mxu0 0.0
        %410 = vmatprep.subr.mxu0 0.0
        %411 = vmatpush2.msra.mxu0 0.0
        %412 = vmatprep.subr.mxu0 0.0
        %413 = vmatpush2.msra.mxu0 0.0
        %414 = vmatprep.subr.mxu0 0.0
        %415 = vmatpush2.msra.mxu0 0.0
        %416 = vmatprep.subr.mxu0 0.0
        %417 = vmatpush2.msra.mxu0 0.0
        %418 = vmatprep.subr.mxu0 0.0
        %419 = vmatpush2.msra.mxu0 0.0
        %420 = vmatprep.subr.mxu0 0.0
        %421 = vmatpush2.msra.mxu0 0.0
        %422 = vmatprep.mubr.f32.mxu0 0.0
        %423 = vmatmul.mubr.f32.gmra.mxu0 %v277
        %v424 = vpop.f32.mrf.mxu0
        %v425 = vadd.f32 0.0, %v424
        %v426 = vpop.f32.mrf.mxu0
        %v427 = vadd.f32 0.0, %v426
        %428 = vdwg.mxu0
        %429 = vmatprep.subr.mxu0 %v356
        %430 = vmatpush1.msra.mxu0 %v355
        %431 = vmatprep.subr.mxu0 %v351
        %432 = vmatpush1.msra.mxu0 %v350
        %433 = vmatprep.subr.mxu0 %v346
        %434 = vmatpush1.msra.mxu0 %v345
        %435 = vmatprep.subr.mxu0 %v341
        %436 = vmatpush1.msra.mxu0 %v340
        %437 = vmatprep.subr.mxu0 %v336
        %438 = vmatpush1.msra.mxu0 %v335
        %439 = vmatprep.subr.mxu0 %v331
        %440 = vmatpush1.msra.mxu0 %v330
        %441 = vmatprep.subr.mxu0 %v326
        %442 = vmatpush1.msra.mxu0 %v325
        %443 = vmatprep.subr.mxu0 %v321
        %444 = vmatpush1.msra.mxu0 %v320
        %445 = vmatprep.subr.mxu0 %v316
        %446 = vmatpush1.msra.mxu0 %v315
        %447 = vmatprep.subr.mxu0 %v311
        %448 = vmatpush1.msra.mxu0 %v310
        %449 = vmatprep.subr.mxu0 %v306
        %450 = vmatpush1.msra.mxu0 %v305
        %451 = vmatprep.subr.mxu0 %v301
        %452 = vmatpush1.msra.mxu0 %v300
        %453 = vmatprep.subr.mxu0 %v296
        %454 = vmatpush1.msra.mxu0 %v295
        %455 = vmatprep.subr.mxu0 %v291
        %456 = vmatpush1.msra.mxu0 %v290
        %457 = vmatprep.subr.mxu0 %v286
        %458 = vmatpush1.msra.mxu0 %v285
        %459 = vmatprep.subr.mxu0 %v281
        %460 = vmatpush1.msra.mxu0 %v280
        %461 = vmatprep.subr.mxu0 0.0
        %462 = vmatpush2.msra.mxu0 0.0
        %463 = vmatprep.subr.mxu0 0.0
        %464 = vmatpush2.msra.mxu0 0.0
        %465 = vmatprep.subr.mxu0 0.0
        %466 = vmatpush2.msra.mxu0 0.0
        %467 = vmatprep.subr.mxu0 0.0
        %468 = vmatpush2.msra.mxu0 0.0
        %469 = vmatprep.subr.mxu0 0.0
        %470 = vmatpush2.msra.mxu0 0.0
        %471 = vmatprep.subr.mxu0 0.0
        %472 = vmatpush2.msra.mxu0 0.0
        %473 = vmatprep.subr.mxu0 0.0
        %474 = vmatpush2.msra.mxu0 0.0
        %475 = vmatprep.subr.mxu0 0.0
        %476 = vmatpush2.msra.mxu0 0.0
        %477 = vmatprep.subr.mxu0 0.0
        %478 = vmatpush2.msra.mxu0 0.0
        %479 = vmatprep.subr.mxu0 0.0
        %480 = vmatpush2.msra.mxu0 0.0
        %481 = vmatprep.subr.mxu0 0.0
        %482 = vmatpush2.msra.mxu0 0.0
        %483 = vmatprep.subr.mxu0 0.0
        %484 = vmatpush2.msra.mxu0 0.0
        %485 = vmatprep.subr.mxu0 0.0
        %486 = vmatpush2.msra.mxu0 0.0
        %487 = vmatprep.subr.mxu0 0.0
        %488 = vmatpush2.msra.mxu0 0.0
        %489 = vmatprep.subr.mxu0 0.0
        %490 = vmatpush2.msra.mxu0 0.0
        %491 = vmatprep.subr.mxu0 0.0
        %492 = vmatpush2.msra.mxu0 0.0
        %493 = vmatprep.mubr.f32.mxu0 0.0
        %494 = vmatmul.mubr.f32.gmra.mxu0 %v277
        %v495 = vpop.f32.mrf.mxu0
        %v496 = vadd.f32 0.0, %v495
        %v497 = vpop.f32.mrf.mxu0
        %v498 = vadd.f32 0.0, %v497
        %499 = vdwg.mxu0
        %500 = vmatprep.subr.mxu0 0.0
        %501 = vmatpush1.msra.mxu0 %v357
        %502 = vmatprep.subr.mxu0 0.0
        %503 = vmatpush1.msra.mxu0 %v352
        %504 = vmatprep.subr.mxu0 0.0
        %505 = vmatpush1.msra.mxu0 %v347
        %506 = vmatprep.subr.mxu0 0.0
        %507 = vmatpush1.msra.mxu0 %v342
        %508 = vmatprep.subr.mxu0 0.0
        %509 = vmatpush1.msra.mxu0 %v337
        %510 = vmatprep.subr.mxu0 0.0
        %511 = vmatpush1.msra.mxu0 %v332
        %512 = vmatprep.subr.mxu0 0.0
        %513 = vmatpush1.msra.mxu0 %v327
        %514 = vmatprep.subr.mxu0 0.0
        %515 = vmatpush1.msra.mxu0 %v322
        %516 = vmatprep.subr.mxu0 0.0
        %517 = vmatpush1.msra.mxu0 %v317
        %518 = vmatprep.subr.mxu0 0.0
        %519 = vmatpush1.msra.mxu0 %v312
        %520 = vmatprep.subr.mxu0 0.0
        %521 = vmatpush1.msra.mxu0 %v307
        %522 = vmatprep.subr.mxu0 0.0
        %523 = vmatpush1.msra.mxu0 %v302
        %524 = vmatprep.subr.mxu0 0.0
        %525 = vmatpush1.msra.mxu0 %v297
        %526 = vmatprep.subr.mxu0 0.0
        %527 = vmatpush1.msra.mxu0 %v292
        %528 = vmatprep.subr.mxu0 0.0
        %529 = vmatpush1.msra.mxu0 %v287
        %530 = vmatprep.subr.mxu0 0.0
        %531 = vmatpush1.msra.mxu0 %v282
        %532 = vmatprep.subr.mxu0 0.0
        %533 = vmatpush2.msra.mxu0 0.0
        %534 = vmatprep.subr.mxu0 0.0
        %535 = vmatpush2.msra.mxu0 0.0
        %536 = vmatprep.subr.mxu0 0.0
        %537 = vmatpush2.msra.mxu0 0.0
        %538 = vmatprep.subr.mxu0 0.0
        %539 = vmatpush2.msra.mxu0 0.0
        %540 = vmatprep.subr.mxu0 0.0
        %541 = vmatpush2.msra.mxu0 0.0
        %542 = vmatprep.subr.mxu0 0.0
        %543 = vmatpush2.msra.mxu0 0.0
        %544 = vmatprep.subr.mxu0 0.0
        %545 = vmatpush2.msra.mxu0 0.0
        %546 = vmatprep.subr.mxu0 0.0
        %547 = vmatpush2.msra.mxu0 0.0
        %548 = vmatprep.subr.mxu0 0.0
        %549 = vmatpush2.msra.mxu0 0.0
        %550 = vmatprep.subr.mxu0 0.0
        %551 = vmatpush2.msra.mxu0 0.0
        %552 = vmatprep.subr.mxu0 0.0
        %553 = vmatpush2.msra.mxu0 0.0
        %554 = vmatprep.subr.mxu0 0.0
        %555 = vmatpush2.msra.mxu0 0.0
        %556 = vmatprep.subr.mxu0 0.0
        %557 = vmatpush2.msra.mxu0 0.0
        %558 = vmatprep.subr.mxu0 0.0
        %559 = vmatpush2.msra.mxu0 0.0
        %560 = vmatprep.subr.mxu0 0.0
        %561 = vmatpush2.msra.mxu0 0.0
        %562 = vmatprep.subr.mxu0 0.0
        %563 = vmatpush2.msra.mxu0 0.0
        %564 = vmatprep.mubr.f32.mxu0 0.0
        %565 = vmatmul.mubr.f32.gmra.mxu0 %v277
        %v566 = vpop.f32.mrf.mxu0
        %v567 = vadd.f32 0.0, %v566
        %v568 = vpop.f32.mrf.mxu0
        %569 = vdwg.mxu0
        %v575 = vcombine.low %v425, %v427
        %v576 = vcombine.low %v496, %v498
        %v578 = vunpack.c.l.s4 1983009808
        %v579 = vunpack.c.0.s8 %v578
        %v580 = vlaneseq
        %v581 = vshrl.u32 %v580, 7
        %v582 = vsub.s32 %v579, %v581
        %v583 = vrot.slane %v575, %v582
        %v585 = vunpack.c.l.s4 1983009808
        %v586 = vunpack.c.0.s8 %v585
        %v587 = vlaneseq
        %v588 = vshrl.u32 %v587, 7
        %v589 = vsub.s32 %v586, %v588
        %v590 = vrot.slane %v576, %v589
        %v591 = vcombine.low %v583, %v590
        %v593 = vunpack.c.l.s4 1983009808
        %v594 = vunpack.c.0.s8 %v593
        %v595 = vlaneseq
        %v596 = vshrl.u32 %v595, 7
        %v597 = vsub.s32 %v594, %v596
        %v598 = vrot.slane %v567, %v597
        %v601 = vadd.f32 %v275, %v591
        %v602 = vadd.f32 %v276, %v598
        %v603 = vsub.f32 0.0, %v601
        %v604 = vmul.f32 %v603, 1.442695
        %v605 = vpow.pop %v604
        %v606 = vadd.f32 %v605, 1.0
        %v607 = vrcp.pop %v606
        %v609 = vrot.slane %v601, 2
        %v611 = vsub.f32 0.0, %v609
        %v612 = vmul.f32 %v611, 1.442695
        %v613 = vpow.pop %v612
        %v614 = vadd.f32 %v613, 1.0
        %v615 = vrcp.pop %v614
        %v616 = vrot.slane %v601, 4
        %v618 = vsub.f32 0.0, %v616
        %v619 = vmul.f32 %v618, 1.442695
        %v620 = vpow.pop %v619
        %v621 = vadd.f32 %v620, 1.0
        %v622 = vrcp.pop %v621
        %v623 = vrot.slane %v601, 6
        %v625 = vmax.f32 %v623, %v602
        %v626 = vld [vmem:[#allocation3] sm:$0x3]
        %v627 = vmul.f32 %v615, %v626
        %v628 = vmul.f32 %v607, %v625
        %v629 = vadd.f32 %v627, %v628
        %v630 = vtanh.pop %v629
        %v631 = vmul.f32 %v622, %v630
        %632 = vst [vmem:[#allocation3] sm:$0x3] %v629
        %633 = vst [vmem:[#allocation2] sm:$0x3] %v631
        %634 = vst [vmem:[%s264] sm:$0x3] %v631
        %p635 = scmp.eq.s32.totalorder %s25, 7
        // Predicated region
        $region53: #{tpu_custom_call.1} parent=35 // pred_check
          %p636 = pneg %p635
        $region54: #{tpu_custom_call.1} parent=35 // pred_check_branch
          %638 = sbr.rel (%p636) target = $region56
        $region55: #{tpu_custom_call.1} parent=35 // pred_region
          %639 = vst [vmem:[#allocation11] sm:$0x3] %v629
        $region56: #{tpu_custom_call.1} parent=35 // pred_fallthru
          _
        %s640 = sand.u32 %s122, 1
        %s641 = scalar_lea.sflag [#allocation6], %s640
        %s642 = sand.u32 %s122, 1
        %s643 = smul.addr %s642, 2
        %s644 = scalar_lea.vmem [#allocation10], %s643
        // Predicated region
        $region57: #{tpu_custom_call.1} parent=35 // pred_check
          %p645 = pneg %p132
        $region58: #{tpu_custom_call.1} parent=35 // pred_check_branch
          %647 = sbr.rel (%p645) target = $region60
        $region59: #{tpu_custom_call.1} parent=35 // pred_region
          %s649 = ssub.s32 32, 32
          %650 = vsyncadd %s641, %s649
          %s651 = smul.addr %s25, 32
          %s652 = scalar_lea.hbm %s4, %s651
          %s654 = sshll.u32 %s644, 4
          %s655 = int_to_ptr.vmem [resolvable:$true] %s654
          %657 = dma.vmem_to_hbm [thread:$0]  %s655, 32, %s652, %s641
        $region60: #{tpu_custom_call.1} parent=35 // pred_fallthru
          _
        // Predicated region
        $region61: #{tpu_custom_call.1} parent=35 // pred_check
          %p658 = pneg %p153
        $region62: #{tpu_custom_call.1} parent=35 // pred_check_branch
          %660 = sbr.rel (%p658) target = $region64
        $region63: #{tpu_custom_call.1} parent=35 // pred_region
          %s662 = ssub.s32 32, 32
          %663 = vsyncadd [#allocation12], %s662
          %s665 = sshll.u32 [#allocation11], 4
          %s666 = int_to_ptr.vmem [resolvable:$true] %s665
          %668 = dma.vmem_to_hbm [thread:$0]  %s666, 32, %s5, [#allocation12]
        $region64: #{tpu_custom_call.1} parent=35 // pred_fallthru
          _
        // Predicated region
        $region65: #{tpu_custom_call.1} parent=35 // pred_check
          %p669 = pneg %p153
        $region66: #{tpu_custom_call.1} parent=35 // pred_check_branch
          %671 = sbr.rel (%p669) target = $region68
        $region67: #{tpu_custom_call.1} parent=35 // pred_region
          %672 = dma.done [#allocation12], 32
        $region68: #{tpu_custom_call.1} parent=35 // pred_fallthru
          _
      $region36: #{tpu_custom_call.1} parent=5 // pred_fallthru
        _
      %p673 = scmp.le.s32.totalorder 2, %s20
      // Predicated region
      $region69: #{tpu_custom_call.1} parent=5 // pred_check
        %p674 = pneg %p673
      $region70: #{tpu_custom_call.1} parent=5 // pred_check_branch
        %676 = sbr.rel (%p674) target = $region72
      $region71: #{tpu_custom_call.1} parent=5 // pred_region
        %s677 = ssub.s32 %s20, 2
        // Predicated region
        $region73: #{tpu_custom_call.1} parent=71 // pred_check
          %p678 = pneg %p138
        $region74: #{tpu_custom_call.1} parent=71 // pred_check_branch
          %680 = sbr.rel (%p678) target = $region76
        $region75: #{tpu_custom_call.1} parent=71 // pred_region
          %s681 = sand.u32 %s123, 1
          %s682 = scalar_lea.sflag [#allocation6], %s681
          %s683 = sand.u32 %s123, 1
          %s684 = smul.addr %s683, 2
          %s685 = scalar_lea.vmem [#allocation10], %s684
          %686 = dma.done %s682, 32
        $region76: #{tpu_custom_call.1} parent=71 // pred_fallthru
          _
      $region72: #{tpu_custom_call.1} parent=5 // pred_fallthru
        _
    $region6: #{tpu_custom_call.1} parent=1 // loop_footer
      %s24 = sadd.s32 1, %s20
    $region7: #{tpu_custom_call.1} parent=1 // loop_footer_branch
      %19 = sbr.rel target = $region3
    $region8: #{tpu_custom_call.1} parent=1 // loop_exit
      _
    %687 = vsyncpa [#allocation5], 1
    %s688 = scalar_lea.sflag [#allocation5], 1
    %689 = vsyncpa %s688, 1
    %690 = vsyncpa [#allocation8], 1
    %691 = vsyncpa [#allocation6], 1
    %s692 = scalar_lea.sflag [#allocation6], 1
    %693 = vsyncpa %s692, 1
    %694 = vsyncpa [#allocation12], 1

</llo_original>
